<compile_context>
chip_gen: v7x
topology: tpu7x:2x2x1
jax: 0.10.0
libtpu: 0.0.40
codegen_flags: <defaults>
</compile_context>

<pallas_src>
import jax
import jax.numpy as jnp
from jax.experimental import pallas as pl
from jax.experimental.pallas import tpu as pltpu


def _attn_kernel(sl_ref, xlast_ref, x2d_ref, wq_ref, bq_ref, wkv_ref, bkv_ref, o_ref):
    bt = xlast_ref.shape[0]                      # batch tile
    s = x2d_ref.shape[0] // bt                   # sequence length
    o_pad = wq_ref.shape[1]                      # lane-padded output dim

    # Fused K/V projection for the whole batch tile: one MXU-shaped bf16 matmul,
    # f32 accumulation; bias add (f32) on the VPU.
    kv = jnp.dot(x2d_ref[...], wkv_ref[...],
                 preferred_element_type=jnp.float32)                  # (bt*s, 2*o_pad) f32
    kv = (kv + bkv_ref[...]).reshape(bt, s, 2 * o_pad)
    k = kv[:, :, :o_pad]                                              # (bt, s, o_pad)
    v = kv[:, :, o_pad:]                                              # (bt, s, o_pad)

    # Batched query projection from the pre-gathered last-valid rows.
    q = jnp.dot(xlast_ref[...], wq_ref[...],
                preferred_element_type=jnp.float32) + bq_ref[...]     # (bt, o_pad) f32

    # Scores on the VPU/XLU: broadcast-multiply + lane reduce (no M=1 MXU matmuls,
    # no per-batch transpose of k).
    scores = jnp.sum(q[:, None, :] * k, axis=-1)                      # (bt, s) f32

    # Masked softmax over key positions 0 .. seq_len-2.  Mask BEFORE the max so an
    # invalid score (query's own row / padding) cannot underflow the valid exps.
    sl = sl_ref[...]                                                  # (bt, 1) int32
    pos = jax.lax.broadcasted_iota(jnp.int32, scores.shape, 1)
    valid = pos < (sl - 1)
    neg = jnp.float32(jnp.finfo(jnp.float32).min)
    scores_m = jnp.where(valid, scores, neg)
    m = jnp.max(scores_m, axis=-1, keepdims=True)                     # max over valid only
    e = jnp.where(valid, jnp.exp(scores_m - m), 0.0)
    denom = jnp.sum(e, axis=-1, keepdims=True)
    denom = jnp.where(denom > 0.0, denom, 1.0)                        # seq_len <= 1 -> 0, not NaN
    p = e * pl.reciprocal(denom, approx=True)                         # (bt, s)

    # Output on the VPU: broadcast-multiply + sublane reduce over key positions.
    out = jnp.sum(p[:, :, None] * v, axis=1)                          # (bt, o_pad) f32
    o_ref[...] = jnp.tanh(out)


def _pick_b_tile(B, S, D, o_pad, budget_bytes=20 * 1024 * 1024):
    """Largest batch tile (multiple of 16) whose pipeline + compute VMEM fits the budget."""
    best = 16
    for t in (256, 128, 64, 32, 16):
        pipeline = (2 * t * S * D * 2          # x2d slab, bf16, double-buffered
                    + 2 * t * D * 2            # x_last, bf16, double-buffered
                    + 2 * t * 128 * 4          # seq_len (lane-padded int32)
                    + 2 * 3 * D * o_pad * 2    # Wq + fused Wk|Wv, bf16 (constant blocks)
                    + 2 * 8 * 3 * o_pad * 4    # biases (sublane-padded f32)
                    + 2 * t * o_pad * 4)       # output, f32, double-buffered
        compute = (t * S * 2 * o_pad * 4       # kv f32 accumulator
                   + 2 * t * S * o_pad * 4)    # broadcast intermediates
        if pipeline + compute <= budget_bytes:
            best = t
            break
    # Keep >= 2 grid steps when the batch is large enough (v7x megacore sharding;
    # no-op on single-TC v5e/v6e and on tiny batches).
    while best > 16 and -(-B // best) < 2:
        best //= 2
    return best


def attention_layer_with_mask(x, mask, wq, bq, wk, bk, wv, bv, *, b_tile=None):
    """x: (B, S, D) f32; mask: (B, S) int; weights (D, O); biases (1, O) -> (B, O) f32."""
    B, S, D = x.shape
    O = wq.shape[1]
    lane = 128
    o_pad = -(-O // lane) * lane
    if b_tile is None:
        b_tile = _pick_b_tile(B, S, D, o_pad)

    seq_len = jnp.sum(mask.astype(jnp.int32), axis=1)                 # (B,)
    # Clamp to [1, S]: an all-zero mask row would otherwise index row -1 (TPU does no
    # runtime bounds check on VMEM); clamped rows attend over zero keys and output 0.
    seq_len = jnp.clip(seq_len, 1, S)

    # Gather last valid row of every batch -> one batched query matmul in the kernel.
    x_last = x[jnp.arange(B), seq_len - 1]                            # (B, D)

    def _pad_cols(a):
        return jnp.pad(a, ((0, 0), (0, o_pad - O)))

    # bf16 MXU inputs; f32 biases (added post-matmul in f32).
    wq_p = _pad_cols(wq).astype(jnp.bfloat16)
    wkv = jnp.concatenate([_pad_cols(wk), _pad_cols(wv)], axis=1).astype(jnp.bfloat16)
    bq_p = _pad_cols(bq).astype(jnp.float32)
    bkv = jnp.concatenate([_pad_cols(bk), _pad_cols(bv)], axis=1).astype(jnp.float32)

    # Pad the batch dim to a multiple of the tile; padded rows get seq_len = 1 -> output 0.
    b_pad = -(-B // b_tile) * b_tile
    x_p = jnp.pad(x, ((0, b_pad - B), (0, 0), (0, 0))).astype(jnp.bfloat16)
    x2d = x_p.reshape(b_pad * S, D)                                   # lane-friendly 2D slab
    x_last_p = jnp.pad(x_last, ((0, b_pad - B), (0, 0))).astype(jnp.bfloat16)
    sl_p = jnp.pad(seq_len, (0, b_pad - B), constant_values=1).reshape(b_pad, 1)

    out = pl.pallas_call(
        _attn_kernel,
        out_shape=jax.ShapeDtypeStruct((b_pad, o_pad), jnp.float32),
        grid=(b_pad // b_tile,),
        in_specs=[
            pl.BlockSpec((b_tile, 1), lambda i: (i, 0)),              # seq_len
            pl.BlockSpec((b_tile, D), lambda i: (i, 0)),              # x_last (bf16)
            pl.BlockSpec((b_tile * S, D), lambda i: (i, 0)),          # x slab (bf16)
            pl.BlockSpec((D, o_pad), lambda i: (0, 0)),               # Wq (bf16)
            pl.BlockSpec((1, o_pad), lambda i: (0, 0)),               # bq (f32)
            pl.BlockSpec((D, 2 * o_pad), lambda i: (0, 0)),           # fused Wk|Wv (bf16)
            pl.BlockSpec((1, 2 * o_pad), lambda i: (0, 0)),           # fused bk|bv (f32)
        ],
        out_specs=pl.BlockSpec((b_tile, o_pad), lambda i: (i, 0)),
        compiler_params=pltpu.CompilerParams(
            dimension_semantics=("parallel",),                        # independent batch tiles
            vmem_limit_bytes=32 * 1024 * 1024),
    )(sl_p, x_last_p, x2d, wq_p, bq_p, wkv, bkv)

    return out[:B, :O]                                                # strip padding


def _reference(x, mask, wq, bq, wk, bk, wv, bv):
    """Pure-JAX f32 replica of the PyTorch forward (eval mode, dropout=identity)."""
    seq_len = jnp.sum(mask.astype(jnp.int32), axis=1)
    outs = []
    for i in range(x.shape[0]):
        sl = int(seq_len[i])
        q = x[i, sl - 1:sl, :] @ wq + bq                 # (1, O)
        k = x[i, :sl - 1, :] @ wk + bk                   # (sl-1, O)
        v = x[i, :sl - 1, :] @ wv + bv
        s = jax.nn.softmax(q @ k.T, axis=-1)             # (1, sl-1)
        outs.append(jnp.tanh(s @ v))                     # (1, O)
    return jnp.concatenate(outs, axis=0)                 # (B, O)


if __name__ == "__main__":
    B, S, D, O = 2, 8, 32, 32
    key = jax.random.PRNGKey(0)
    kx, kq, kk, kv, kbq, kbk, kbv = jax.random.split(key, 7)

    x = jax.random.normal(kx, (B, S, D), dtype=jnp.float32)

    # Deterministic parameter init (Linear-like scale).
    scale = 1.0 / jnp.sqrt(jnp.float32(D))
    wq = jax.random.uniform(kq, (D, O), jnp.float32, -scale, scale)
    wk = jax.random.uniform(kk, (D, O), jnp.float32, -scale, scale)
    wv = jax.random.uniform(kv, (D, O), jnp.float32, -scale, scale)
    bq = jax.random.uniform(kbq, (1, O), jnp.float32, -scale, scale)
    bk = jax.random.uniform(kbk, (1, O), jnp.float32, -scale, scale)
    bv = jax.random.uniform(kbv, (1, O), jnp.float32, -scale, scale)

    # mask: leading ones per row (variable valid lengths: 8 and 5).
    mask = jnp.array(
        [[1, 1, 1, 1, 1, 1, 1, 1],
         [1, 1, 1, 1, 1, 0, 0, 0]], dtype=jnp.int32)

    out = attention_layer_with_mask(x, mask, wq, bq, wk, bk, wv, bv)
    out = jax.block_until_ready(out)

    ref = _reference(x, mask, wq, bq, wk, bk, wv, bv)
    assert out.shape == (B, O)
    # Tolerance loosened vs. the f32 reference because MXU inputs are bfloat16.
    assert jnp.allclose(out, ref, atol=5e-2, rtol=5e-2), (
        f"mismatch: max abs err {jnp.max(jnp.abs(out - ref))}")

    print("KERNEL_OK")
</pallas_src>

<mosaic_0001>
module attributes {stable_mosaic.version = 11 : i64} {
  func.func @_attn_kernel(%arg0: i32, %arg1: memref<16x1xi32, #tpu.memory_space<vmem>>, %arg2: memref<16x32xbf16, #tpu.memory_space<vmem>>, %arg3: memref<128x32xbf16, #tpu.memory_space<vmem>>, %arg4: memref<32x128xbf16, #tpu.memory_space<vmem>>, %arg5: memref<1x128xf32, #tpu.memory_space<vmem>>, %arg6: memref<32x256xbf16, #tpu.memory_space<vmem>>, %arg7: memref<1x256xf32, #tpu.memory_space<vmem>>, %arg8: memref<16x128xf32, #tpu.memory_space<vmem>>) attributes {dimension_semantics = [#tpu.dimension_semantics<parallel>], iteration_bounds = array<i64: 1>, scalar_prefetch = 0 : i64, scratch_operands = 0 : i64, tpu.core_type = #tpu.core_type<tc>, window_params = [{transform_indices = @transform_0, window_bounds = array<i64: 16, 1>}, {transform_indices = @transform_1, window_bounds = array<i64: 16, 32>}, {transform_indices = @transform_2, window_bounds = array<i64: 128, 32>}, {pipeline_mode = #tpu.pipeline_mode<synchronous>, transform_indices = @transform_3, window_bounds = array<i64: 32, 128>}, {pipeline_mode = #tpu.pipeline_mode<synchronous>, transform_indices = @transform_4, window_bounds = array<i64: 1, 128>}, {pipeline_mode = #tpu.pipeline_mode<synchronous>, transform_indices = @transform_5, window_bounds = array<i64: 32, 256>}, {pipeline_mode = #tpu.pipeline_mode<synchronous>, transform_indices = @transform_6, window_bounds = array<i64: 1, 256>}, {transform_indices = @transform_7, window_bounds = array<i64: 16, 128>}]} {
    %c0 = arith.constant 0 : index
    %c0_0 = arith.constant 0 : index
    %0 = vector.load %arg3[%c0, %c0_0] : memref<128x32xbf16, #tpu.memory_space<vmem>>, vector<128x32xbf16>
    %c0_1 = arith.constant 0 : index
    %c0_2 = arith.constant 0 : index
    %1 = vector.load %arg6[%c0_1, %c0_2] : memref<32x256xbf16, #tpu.memory_space<vmem>>, vector<32x256xbf16>
    %cst = arith.constant dense<0.000000e+00> : vector<128x256xf32>
    %2 = tpu.matmul %0, %1, %cst {dimension_numbers = #tpu.dot_dimension_numbers<[1], [0], [0], [1], [0, 0, 1, 1], [], []>} : vector<128x32xbf16>, vector<32x256xbf16>, vector<128x256xf32> -> vector<128x256xf32>
    %c0_3 = arith.constant 0 : index
    %c0_4 = arith.constant 0 : index
    %3 = vector.load %arg7[%c0_3, %c0_4] : memref<1x256xf32, #tpu.memory_space<vmem>>, vector<1x256xf32>
    %4 = vector.broadcast %3 : vector<1x256xf32> to vector<128x256xf32>
    %5 = arith.addf %2, %4 : vector<128x256xf32>
    %6 = vector.shape_cast %5 : vector<128x256xf32> to vector<16x8x256xf32>
    %7 = vector.extract_strided_slice %6 {offsets = [0, 0, 0], sizes = [16, 8, 128], strides = [1, 1, 1]} : vector<16x8x256xf32> to vector<16x8x128xf32>
    %8 = vector.extract_strided_slice %6 {offsets = [0, 0, 128], sizes = [16, 8, 128], strides = [1, 1, 1]} : vector<16x8x256xf32> to vector<16x8x128xf32>
    %c0_5 = arith.constant 0 : index
    %c0_6 = arith.constant 0 : index
    %9 = vector.load %arg2[%c0_5, %c0_6] : memref<16x32xbf16, #tpu.memory_space<vmem>>, vector<16x32xbf16>
    %c0_7 = arith.constant 0 : index
    %c0_8 = arith.constant 0 : index
    %10 = vector.load %arg4[%c0_7, %c0_8] : memref<32x128xbf16, #tpu.memory_space<vmem>>, vector<32x128xbf16>
    %cst_9 = arith.constant dense<0.000000e+00> : vector<16x128xf32>
    %11 = tpu.matmul %9, %10, %cst_9 {dimension_numbers = #tpu.dot_dimension_numbers<[1], [0], [0], [1], [0, 0, 1, 1], [], []>} : vector<16x32xbf16>, vector<32x128xbf16>, vector<16x128xf32> -> vector<16x128xf32>
    %c0_10 = arith.constant 0 : index
    %c0_11 = arith.constant 0 : index
    %12 = vector.load %arg5[%c0_10, %c0_11] : memref<1x128xf32, #tpu.memory_space<vmem>>, vector<1x128xf32>
    %13 = vector.broadcast %12 : vector<1x128xf32> to vector<16x128xf32>
    %14 = arith.addf %11, %13 : vector<16x128xf32>
    %15 = vector.shape_cast %14 : vector<16x128xf32> to vector<16x1x128xf32>
    %16 = vector.broadcast %15 : vector<16x1x128xf32> to vector<16x8x128xf32>
    %17 = arith.mulf %16, %7 : vector<16x8x128xf32>
    %cst_12 = arith.constant dense<0.000000e+00> : vector<16x8xf32>
    %18 = vector.multi_reduction <add>, %17, %cst_12 [2] : vector<16x8x128xf32> to vector<16x8xf32>
    %c0_13 = arith.constant 0 : index
    %c0_14 = arith.constant 0 : index
    %19 = vector.load %arg1[%c0_13, %c0_14] : memref<16x1xi32, #tpu.memory_space<vmem>>, vector<16x1xi32>
    %20 = tpu.iota {dimensions = array<i32: 1>} : vector<16x8xi32>
    %c1_i32 = arith.constant 1 : i32
    %21 = vector.broadcast %c1_i32 : i32 to vector<16x1xi32>
    %22 = arith.subi %19, %21 : vector<16x1xi32>
    %23 = vector.broadcast %22 : vector<16x1xi32> to vector<16x8xi32>
    %24 = arith.cmpi slt, %20, %23 : vector<16x8xi32>
    %cst_15 = arith.constant -3.40282347E+38 : f32
    %25 = vector.broadcast %cst_15 : f32 to vector<16x8xf32>
    %26 = arith.select %24, %18, %25 : vector<16x8xi1>, vector<16x8xf32>
    %cst_16 = arith.constant dense<0xFF800000> : vector<16xf32>
    %27 = vector.multi_reduction <maximumf>, %26, %cst_16 [1] : vector<16x8xf32> to vector<16xf32>
    %28 = vector.shape_cast %27 : vector<16xf32> to vector<16x1xf32>
    %29 = vector.broadcast %28 : vector<16x1xf32> to vector<16x8xf32>
    %30 = arith.subf %26, %29 : vector<16x8xf32>
    %31 = math.exp %30 : vector<16x8xf32>
    %cst_17 = arith.constant 0.000000e+00 : f32
    %32 = vector.broadcast %cst_17 : f32 to vector<16x8xf32>
    %33 = arith.select %24, %31, %32 : vector<16x8xi1>, vector<16x8xf32>
    %cst_18 = arith.constant dense<0.000000e+00> : vector<16xf32>
    %34 = vector.multi_reduction <add>, %33, %cst_18 [1] : vector<16x8xf32> to vector<16xf32>
    %35 = vector.shape_cast %34 : vector<16xf32> to vector<16x1xf32>
    %cst_19 = arith.constant 0.000000e+00 : f32
    %36 = vector.broadcast %cst_19 : f32 to vector<16x1xf32>
    %37 = arith.cmpf ogt, %35, %36 : vector<16x1xf32>
    %cst_20 = arith.constant 1.000000e+00 : f32
    %38 = vector.broadcast %cst_20 : f32 to vector<16x1xf32>
    %39 = arith.select %37, %35, %38 : vector<16x1xi1>, vector<16x1xf32>
    %40 = tpu.reciprocal %39 {approx = true} : vector<16x1xf32> -> vector<16x1xf32>
    %41 = vector.broadcast %40 : vector<16x1xf32> to vector<16x8xf32>
    %42 = arith.mulf %33, %41 : vector<16x8xf32>
    %43 = vector.shape_cast %42 : vector<16x8xf32> to vector<16x8x1xf32>
    %44 = vector.broadcast %43 : vector<16x8x1xf32> to vector<16x8x128xf32>
    %45 = arith.mulf %44, %8 : vector<16x8x128xf32>
    %cst_21 = arith.constant dense<0.000000e+00> : vector<16x128xf32>
    %46 = vector.multi_reduction <add>, %45, %cst_21 [1] : vector<16x8x128xf32> to vector<16x128xf32>
    %47 = math.tanh %46 : vector<16x128xf32>
    %c0_22 = arith.constant 0 : index
    %c0_23 = arith.constant 0 : index
    %48 = vector.load %arg8[%c0_22, %c0_23] : memref<16x128xf32, #tpu.memory_space<vmem>>, vector<16x128xf32>
    tpu.vector_store %arg8[%c0_22, %c0_23], %47 {strides = array<i32>} : memref<16x128xf32, #tpu.memory_space<vmem>>, vector<16x128xf32>,
    return
  }
  func.func @transform_0(%arg0: i32) -> (i32, i32) {
    %c0_i32 = arith.constant 0 : i32
    %c0_i32_0 = arith.constant 0 : i32
    return %arg0, %c0_i32 : i32, i32
  }
  func.func @transform_1(%arg0: i32) -> (i32, i32) {
    %c0_i32 = arith.constant 0 : i32
    %c0_i32_0 = arith.constant 0 : i32
    return %arg0, %c0_i32 : i32, i32
  }
  func.func @transform_2(%arg0: i32) -> (i32, i32) {
    %c0_i32 = arith.constant 0 : i32
    %c0_i32_0 = arith.constant 0 : i32
    return %arg0, %c0_i32 : i32, i32
  }
  func.func @transform_3(%arg0: i32) -> (i32, i32) {
    %c0_i32 = arith.constant 0 : i32
    %c0_i32_0 = arith.constant 0 : i32
    %c0_i32_1 = arith.constant 0 : i32
    return %c0_i32, %c0_i32_0 : i32, i32
  }
  func.func @transform_4(%arg0: i32) -> (i32, i32) {
    %c0_i32 = arith.constant 0 : i32
    %c0_i32_0 = arith.constant 0 : i32
    %c0_i32_1 = arith.constant 0 : i32
    return %c0_i32, %c0_i32_0 : i32, i32
  }
  func.func @transform_5(%arg0: i32) -> (i32, i32) {
    %c0_i32 = arith.constant 0 : i32
    %c0_i32_0 = arith.constant 0 : i32
    %c0_i32_1 = arith.constant 0 : i32
    return %c0_i32, %c0_i32_0 : i32, i32
  }
  func.func @transform_6(%arg0: i32) -> (i32, i32) {
    %c0_i32 = arith.constant 0 : i32
    %c0_i32_0 = arith.constant 0 : i32
    %c0_i32_1 = arith.constant 0 : i32
    return %c0_i32, %c0_i32_0 : i32, i32
  }
  func.func @transform_7(%arg0: i32) -> (i32, i32) {
    %c0_i32 = arith.constant 0 : i32
    %c0_i32_0 = arith.constant 0 : i32
    return %arg0, %c0_i32 : i32, i32
  }
}

</mosaic_0001>

<llo_original>
// kernel: tpu_custom_call.1
$region0: #{tpu_custom_call.1}
  #allocation0 [shape = 'u32[]', space=smem, size = 0x4, offset = 0x4, fixed_abs, tag = 'smem constant byte address 0x4 - core index']
  #allocation1 [shape = 'u32[144,128]{1,0:T(1,128)}', space=vmem, size = 0x12000, scoped, tag = 'internal scratch']
  %s0 = inlined_call_operand.vmem [shape: s32[16,1], index: 0, kind: input, shape index: {}]
  %s1 = inlined_call_operand.vmem [shape: bf16[16,32], index: 1, kind: input, shape index: {}]
  %s2 = inlined_call_operand.vmem [shape: bf16[128,32], index: 2, kind: input, shape index: {}]
  %s3 = inlined_call_operand.vmem [shape: bf16[32,128], index: 3, kind: input, shape index: {}]
  %s4 = inlined_call_operand.vmem [shape: f32[1,128], index: 4, kind: input, shape index: {}]
  %s5 = inlined_call_operand.vmem [shape: bf16[32,256], index: 5, kind: input, shape index: {}]
  %s6 = inlined_call_operand.vmem [shape: f32[1,256], index: 6, kind: input, shape index: {}]
  %s7 = inlined_call_operand.hbm [shape: f32[16,128], index: 7, kind: output, shape index: {}]
  %s8 = sld [smem:[#allocation0]]
  $region38: #{tpu_custom_call.1} parent=0
    _
  %s10 = ssub.s32 1, %s8
  %s11 = scalar_select 0, %s10, %s8
  $region1: #{tpu_custom_call.1} parent=0
    #allocation2 [shape = 'u8[8192]{0}', space=vmem, size = 0x2000, scoped, tag = 'output window, operand 0, single buffered']
    #allocation3 [shape = 's32[1]{0}', space=sflag, size = 0x4, scoped, tag = 'scoped memory for tpu_custom_call.1']
    %12 = vsyncpa [#allocation3], 0
    // Predicated region
    $region2: #{tpu_custom_call.1} parent=1 // pred_check
      _
    $region3: #{tpu_custom_call.1} parent=1 // pred_check_branch
      %14 = sbr.rel (0) target = $region5
    $region4: #{tpu_custom_call.1} parent=1 // pred_region
      _
    $region5: #{tpu_custom_call.1} parent=1 // pred_fallthru
      _
    // Predicated region
    $region6: #{tpu_custom_call.1} parent=1 // pred_check
      _
    $region7: #{tpu_custom_call.1} parent=1 // pred_check_branch
      %16 = sbr.rel (0) target = $region9
    $region8: #{tpu_custom_call.1} parent=1 // pred_region
      _
    $region9: #{tpu_custom_call.1} parent=1 // pred_fallthru
      _
    // Predicated region
    $region10: #{tpu_custom_call.1} parent=1 // pred_check
      _
    $region11: #{tpu_custom_call.1} parent=1 // pred_check_branch
      %18 = sbr.rel (0) target = $region13
    $region12: #{tpu_custom_call.1} parent=1 // pred_region
      _
    $region13: #{tpu_custom_call.1} parent=1 // pred_fallthru
      _
    // Predicated region
    $region14: #{tpu_custom_call.1} parent=1 // pred_check
      _
    $region15: #{tpu_custom_call.1} parent=1 // pred_check_branch
      %20 = sbr.rel (0) target = $region17
    $region16: #{tpu_custom_call.1} parent=1 // pred_region
      _
    $region17: #{tpu_custom_call.1} parent=1 // pred_fallthru
      _
    // Predicated region
    $region18: #{tpu_custom_call.1} parent=1 // pred_check
      _
    $region19: #{tpu_custom_call.1} parent=1 // pred_check_branch
      %22 = sbr.rel (0) target = $region21
    $region20: #{tpu_custom_call.1} parent=1 // pred_region
      _
    $region21: #{tpu_custom_call.1} parent=1 // pred_fallthru
      _
    // Predicated region
    $region22: #{tpu_custom_call.1} parent=1 // pred_check
      _
    $region23: #{tpu_custom_call.1} parent=1 // pred_check_branch
      %24 = sbr.rel (0) target = $region25
    $region24: #{tpu_custom_call.1} parent=1 // pred_region
      _
    $region25: #{tpu_custom_call.1} parent=1 // pred_fallthru
      _
    // Predicated region
    $region26: #{tpu_custom_call.1} parent=1 // pred_check
      _
    $region27: #{tpu_custom_call.1} parent=1 // pred_check_branch
      %26 = sbr.rel (0) target = $region29
    $region28: #{tpu_custom_call.1} parent=1 // pred_region
      _
    $region29: #{tpu_custom_call.1} parent=1 // pred_fallthru
      _
    %v28 = vld [vmem:[%s2] sm:$0xf]
    %v29 = vld [vmem:[%s2 + $0x4] sm:$0xf]
    %v30 = vld [vmem:[%s2 + $0x8] sm:$0xf]
    %v31 = vld [vmem:[%s2 + $0xc] sm:$0xf]
    %v32 = vld [vmem:[%s2 + $0x10] sm:$0xf]
    %v33 = vld [vmem:[%s2 + $0x14] sm:$0xf]
    %v34 = vld [vmem:[%s2 + $0x18] sm:$0xf]
    %v35 = vld [vmem:[%s2 + $0x1c] sm:$0xf]
    %v36 = vld [vmem:[%s2 + $0x20] sm:$0xf]
    %v37 = vld [vmem:[%s2 + $0x24] sm:$0xf]
    %v38 = vld [vmem:[%s2 + $0x28] sm:$0xf]
    %v39 = vld [vmem:[%s2 + $0x2c] sm:$0xf]
    %v40 = vld [vmem:[%s2 + $0x30] sm:$0xf]
    %v41 = vld [vmem:[%s2 + $0x34] sm:$0xf]
    %v42 = vld [vmem:[%s2 + $0x38] sm:$0xf]
    %v43 = vld [vmem:[%s2 + $0x3c] sm:$0xf]
    %v44 = vld [vmem:[%s5] sm:$0xff]
    %v45 = vld [vmem:[%s5 + $0x8] sm:$0xff]
    %v46 = vld [vmem:[%s5 + $0x10] sm:$0xff]
    %v47 = vld [vmem:[%s5 + $0x18] sm:$0xff]
    %v48 = vld [vmem:[%s6] sm:$0x3]
    %v50 = vlaneseq
    %v51 = vshrl.u32 %v50, 7
    %v52 = vsub.s32 0, %v51
    %v53 = vrot.slane %v48, %v52
    %v54 = vlaneseq
    %v55 = vshrl.u32 %v54, 7
    %v56 = vsub.s32 1, %v55
    %v57 = vrot.slane %v48, %v56
    %v76 = vunpack.c.l.b16 %v28
    %v77 = vunpack.c.l.b16 %v29
    %v78 = vunpack.c.l.b16 %v30
    %v79 = vunpack.c.l.b16 %v31
    %v80 = vunpack.c.l.b16 %v32
    %v81 = vunpack.c.l.b16 %v33
    %v82 = vunpack.c.l.b16 %v34
    %v83 = vunpack.c.l.b16 %v35
    %v84 = vunpack.c.l.b16 %v36
    %v85 = vunpack.c.l.b16 %v37
    %v86 = vunpack.c.l.b16 %v38
    %v87 = vunpack.c.l.b16 %v39
    %v88 = vunpack.c.l.b16 %v40
    %v89 = vunpack.c.l.b16 %v41
    %v90 = vunpack.c.l.b16 %v42
    %v91 = vunpack.c.l.b16 %v43
    %v92 = vpack.c.b16 %v77, %v76
    %v93 = vpack.c.b16 %v79, %v78
    %v94 = vpack.c.b16 %v81, %v80
    %v95 = vpack.c.b16 %v83, %v82
    %v96 = vpack.c.b16 %v85, %v84
    %v97 = vpack.c.b16 %v87, %v86
    %v98 = vpack.c.b16 %v89, %v88
    %v99 = vpack.c.b16 %v91, %v90
    %v104 = vunpack.c.l.b16 %v44
    %v105 = vunpack.c.h.b16 %v44
    %v106 = vunpack.c.l.b16 %v45
    %v107 = vunpack.c.h.b16 %v45
    %v108 = vunpack.c.l.b16 %v46
    %v109 = vunpack.c.h.b16 %v46
    %v110 = vunpack.c.l.b16 %v47
    %v111 = vunpack.c.h.b16 %v47
    %v112 = vpack.c.b16 %v106, %v104
    %v113 = vpack.c.b16 %v107, %v105
    %v114 = vpack.c.b16 %v110, %v108
    %v115 = vpack.c.b16 %v111, %v109
    %vm120 = vcmask 261120
    %v122 = vsel %vm120, %v92, 0
    %v125 = vsel %vm120, %v93, 0
    %v128 = vsel %vm120, %v94, 0
    %v131 = vsel %vm120, %v95, 0
    %v134 = vsel %vm120, %v96, 0
    %v137 = vsel %vm120, %v97, 0
    %v140 = vsel %vm120, %v98, 0
    %v143 = vsel %vm120, %v99, 0
    %145 = vmatprep.subr.bf16.mxu0 %v113
    %146 = vmatpush1.bf16.msra.mxu0 %v112
    %147 = vmatprep.subr.bf16.mxu0 %v115
    %148 = vmatpush1.bf16.msra.mxu0 %v114
    %149 = vmatprep.subr.bf16.mxu0 0
    %150 = vmatpush1.bf16.msra.mxu0 0
    %151 = vmatprep.subr.bf16.mxu0 0
    %152 = vmatpush1.bf16.msra.mxu0 0
    %153 = vmatprep.subr.bf16.mxu0 0
    %154 = vmatpush1.bf16.msra.mxu0 0
    %155 = vmatprep.subr.bf16.mxu0 0
    %156 = vmatpush1.bf16.msra.mxu0 0
    %157 = vmatprep.subr.bf16.mxu0 0
    %158 = vmatpush1.bf16.msra.mxu0 0
    %159 = vmatprep.subr.bf16.mxu0 0
    %160 = vmatpush1.bf16.msra.mxu0 0
    %161 = vmatprep.subr.bf16.mxu0 0
    %162 = vmatpush1.bf16.msra.mxu0 0
    %163 = vmatprep.subr.bf16.mxu0 0
    %164 = vmatpush1.bf16.msra.mxu0 0
    %165 = vmatprep.subr.bf16.mxu0 0
    %166 = vmatpush1.bf16.msra.mxu0 0
    %167 = vmatprep.subr.bf16.mxu0 0
    %168 = vmatpush1.bf16.msra.mxu0 0
    %169 = vmatprep.subr.bf16.mxu0 0
    %170 = vmatpush1.bf16.msra.mxu0 0
    %171 = vmatprep.subr.bf16.mxu0 0
    %172 = vmatpush1.bf16.msra.mxu0 0
    %173 = vmatprep.subr.bf16.mxu0 0
    %174 = vmatpush1.bf16.msra.mxu0 0
    %175 = vmatprep.subr.bf16.mxu0 0
    %176 = vmatpush1.bf16.msra.mxu0 0
    %177 = vmatprep.mubr.bf16.mxu0 0
    %178 = vmatmul.mubr.bf16.gmra.mrb[0].mxu0 %v122
    %v179 = vpop.f32.mrb[0].mxu0
    %v180 = vadd.f32 %v53, %v179
    %v181 = vpop.f32.mrb[0].mxu0
    %v182 = vadd.f32 %v57, %v181
    %v183 = vpop.f32.mrb[0].mxu0
    %v184 = vadd.f32 %v53, %v183
    %v185 = vpop.f32.mrb[0].mxu0
    %v186 = vadd.f32 %v57, %v185
    %187 = vmatprep.mubr.bf16.mxu0 0
    %188 = vmatmul.mubr.bf16.gmra.mrb[0].mxu0 %v125
    %v189 = vpop.f32.mrb[0].mxu0
    %v190 = vadd.f32 %v53, %v189
    %v191 = vpop.f32.mrb[0].mxu0
    %v192 = vadd.f32 %v57, %v191
    %v193 = vpop.f32.mrb[0].mxu0
    %v194 = vadd.f32 %v53, %v193
    %v195 = vpop.f32.mrb[0].mxu0
    %v196 = vadd.f32 %v57, %v195
    %197 = vmatprep.mubr.bf16.mxu0 0
    %198 = vmatmul.mubr.bf16.gmra.mrb[0].mxu0 %v128
    %v199 = vpop.f32.mrb[0].mxu0
    %v200 = vadd.f32 %v53, %v199
    %v201 = vpop.f32.mrb[0].mxu0
    %v202 = vadd.f32 %v57, %v201
    %v203 = vpop.f32.mrb[0].mxu0
    %v204 = vadd.f32 %v53, %v203
    %v205 = vpop.f32.mrb[0].mxu0
    %v206 = vadd.f32 %v57, %v205
    %207 = vmatprep.mubr.bf16.mxu0 0
    %208 = vmatmul.mubr.bf16.gmra.mrb[0].mxu0 %v131
    %v209 = vpop.f32.mrb[0].mxu0
    %v210 = vadd.f32 %v53, %v209
    %v211 = vpop.f32.mrb[0].mxu0
    %v212 = vadd.f32 %v57, %v211
    %v213 = vpop.f32.mrb[0].mxu0
    %v214 = vadd.f32 %v53, %v213
    %v215 = vpop.f32.mrb[0].mxu0
    %v216 = vadd.f32 %v57, %v215
    %217 = vmatprep.mubr.bf16.mxu0 0
    %218 = vmatmul.mubr.bf16.gmra.mrb[0].mxu0 %v134
    %v219 = vpop.f32.mrb[0].mxu0
    %v220 = vadd.f32 %v53, %v219
    %v221 = vpop.f32.mrb[0].mxu0
    %v222 = vadd.f32 %v57, %v221
    %v223 = vpop.f32.mrb[0].mxu0
    %v224 = vadd.f32 %v53, %v223
    %v225 = vpop.f32.mrb[0].mxu0
    %v226 = vadd.f32 %v57, %v225
    %227 = vmatprep.mubr.bf16.mxu0 0
    %228 = vmatmul.mubr.bf16.gmra.mrb[0].mxu0 %v137
    %v229 = vpop.f32.mrb[0].mxu0
    %v230 = vadd.f32 %v53, %v229
    %v231 = vpop.f32.mrb[0].mxu0
    %v232 = vadd.f32 %v57, %v231
    %v233 = vpop.f32.mrb[0].mxu0
    %v234 = vadd.f32 %v53, %v233
    %v235 = vpop.f32.mrb[0].mxu0
    %v236 = vadd.f32 %v57, %v235
    %237 = vmatprep.mubr.bf16.mxu0 0
    %238 = vmatmul.mubr.bf16.gmra.mrb[0].mxu0 %v140
    %v239 = vpop.f32.mrb[0].mxu0
    %v240 = vadd.f32 %v53, %v239
    %v241 = vpop.f32.mrb[0].mxu0
    %v242 = vadd.f32 %v57, %v241
    %v243 = vpop.f32.mrb[0].mxu0
    %v244 = vadd.f32 %v53, %v243
    %v245 = vpop.f32.mrb[0].mxu0
    %v246 = vadd.f32 %v57, %v245
    %247 = vmatprep.mubr.bf16.mxu0 0
    %248 = vmatmul.mubr.bf16.gmra.mrb[0].mxu0 %v143
    %v249 = vpop.f32.mrb[0].mxu0
    %v250 = vadd.f32 %v53, %v249
    %v251 = vpop.f32.mrb[0].mxu0
    %v252 = vadd.f32 %v57, %v251
    %v253 = vpop.f32.mrb[0].mxu0
    %v254 = vadd.f32 %v53, %v253
    %v255 = vpop.f32.mrb[0].mxu0
    %v256 = vadd.f32 %v57, %v255
    %257 = vdwg.mxu0
    %v258 = vld [vmem:[%s1] sm:$0xf]
    %v259 = vld [vmem:[%s1 + $0x4] sm:$0xf]
    %v260 = vld [vmem:[%s3] sm:$0xf]
    %v261 = vld [vmem:[%s3 + $0x4] sm:$0xf]
    %v262 = vld [vmem:[%s3 + $0x8] sm:$0xf]
    %v263 = vld [vmem:[%s3 + $0xc] sm:$0xf]
    %v264 = vld [vmem:[%s4] sm:$0x1]
    %v266 = vlaneseq
    %v267 = vshrl.u32 %v266, 7
    %v268 = vsub.s32 0, %v267
    %v269 = vrot.slane %v264, %v268
    %v273 = vunpack.c.l.b16 %v258
    %v274 = vunpack.c.l.b16 %v259
    %v275 = vpack.c.b16 %v274, %v273
    %v280 = vunpack.c.l.b16 %v260
    %v281 = vunpack.c.l.b16 %v261
    %v282 = vunpack.c.l.b16 %v262
    %v283 = vunpack.c.l.b16 %v263
    %v284 = vpack.c.b16 %v281, %v280
    %v285 = vpack.c.b16 %v283, %v282
    %v289 = vsel %vm120, %v275, 0
    %291 = vmatprep.subr.bf16.mxu0 0
    %292 = vmatpush1.bf16.msra.mxu0 %v284
    %293 = vmatprep.subr.bf16.mxu0 0
    %294 = vmatpush1.bf16.msra.mxu0 %v285
    %295 = vmatprep.subr.bf16.mxu0 0
    %296 = vmatpush1.bf16.msra.mxu0 0
    %297 = vmatprep.subr.bf16.mxu0 0
    %298 = vmatpush1.bf16.msra.mxu0 0
    %299 = vmatprep.subr.bf16.mxu0 0
    %300 = vmatpush1.bf16.msra.mxu0 0
    %301 = vmatprep.subr.bf16.mxu0 0
    %302 = vmatpush1.bf16.msra.mxu0 0
    %303 = vmatprep.subr.bf16.mxu0 0
    %304 = vmatpush1.bf16.msra.mxu0 0
    %305 = vmatprep.subr.bf16.mxu0 0
    %306 = vmatpush1.bf16.msra.mxu0 0
    %307 = vmatprep.subr.bf16.mxu0 0
    %308 = vmatpush1.bf16.msra.mxu0 0
    %309 = vmatprep.subr.bf16.mxu0 0
    %310 = vmatpush1.bf16.msra.mxu0 0
    %311 = vmatprep.subr.bf16.mxu0 0
    %312 = vmatpush1.bf16.msra.mxu0 0
    %313 = vmatprep.subr.bf16.mxu0 0
    %314 = vmatpush1.bf16.msra.mxu0 0
    %315 = vmatprep.subr.bf16.mxu0 0
    %316 = vmatpush1.bf16.msra.mxu0 0
    %317 = vmatprep.subr.bf16.mxu0 0
    %318 = vmatpush1.bf16.msra.mxu0 0
    %319 = vmatprep.subr.bf16.mxu0 0
    %320 = vmatpush1.bf16.msra.mxu0 0
    %321 = vmatprep.subr.bf16.mxu0 0
    %322 = vmatpush1.bf16.msra.mxu0 0
    %323 = vmatprep.mubr.bf16.mxu0 0
    %324 = vmatmul.mubr.bf16.gmra.mrb[0].mxu0 %v289
    %v325 = vpop.f32.mrb[0].mxu0
    %v326 = vadd.f32 %v269, %v325
    %v327 = vpop.f32.mrb[0].mxu0
    %v328 = vpop.f32.mrb[0].mxu0
    %v329 = vadd.f32 %v269, %v328
    %v330 = vpop.f32.mrb[0].mxu0
    %331 = vdwg.mxu0
    %v334 = vcombine.high %v326, %v326
    %v336 = vunpack.c.l.s4 1966171168
    %v337 = vunpack.c.0.s8 %v336
    %v338 = vlaneseq
    %v339 = vshrl.u32 %v338, 7
    %v340 = vsub.s32 %v337, %v339
    %v341 = vrot.slane %v326, %v340
    %v343 = vunpack.c.l.s4 1966171168
    %v344 = vunpack.c.0.s8 %v343
    %v345 = vlaneseq
    %v346 = vshrl.u32 %v345, 7
    %v347 = vsub.s32 %v344, %v346
    %v348 = vrot.slane %v334, %v347
    %v349 = vcombine.high %v341, %v341
    %v350 = vcombine.high %v348, %v348
    %v352 = vunpack.c.l.s4 1966171168
    %v353 = vunpack.c.0.s8 %v352
    %v354 = vlaneseq
    %v355 = vshrl.u32 %v354, 7
    %v356 = vsub.s32 %v353, %v355
    %v357 = vrot.slane %v341, %v356
    %v359 = vunpack.c.l.s4 1966171168
    %v360 = vunpack.c.0.s8 %v359
    %v361 = vlaneseq
    %v362 = vshrl.u32 %v361, 7
    %v363 = vsub.s32 %v360, %v362
    %v364 = vrot.slane %v348, %v363
    %v366 = vunpack.c.l.s4 1966171168
    %v367 = vunpack.c.0.s8 %v366
    %v368 = vlaneseq
    %v369 = vshrl.u32 %v368, 7
    %v370 = vsub.s32 %v367, %v369
    %v371 = vrot.slane %v349, %v370
    %v373 = vunpack.c.l.s4 1966171168
    %v374 = vunpack.c.0.s8 %v373
    %v375 = vlaneseq
    %v376 = vshrl.u32 %v375, 7
    %v377 = vsub.s32 %v374, %v376
    %v378 = vrot.slane %v350, %v377
    %v379 = vcombine.high %v357, %v357
    %v380 = vcombine.high %v364, %v364
    %v381 = vcombine.high %v371, %v371
    %v382 = vcombine.high %v378, %v378
    %v383 = vcombine.high %v329, %v329
    %v385 = vunpack.c.l.s4 1966171168
    %v386 = vunpack.c.0.s8 %v385
    %v387 = vlaneseq
    %v388 = vshrl.u32 %v387, 7
    %v389 = vsub.s32 %v386, %v388
    %v390 = vrot.slane %v329, %v389
    %v392 = vunpack.c.l.s4 1966171168
    %v393 = vunpack.c.0.s8 %v392
    %v394 = vlaneseq
    %v395 = vshrl.u32 %v394, 7
    %v396 = vsub.s32 %v393, %v395
    %v397 = vrot.slane %v383, %v396
    %v398 = vcombine.high %v390, %v390
    %v399 = vcombine.high %v397, %v397
    %v401 = vunpack.c.l.s4 1966171168
    %v402 = vunpack.c.0.s8 %v401
    %v403 = vlaneseq
    %v404 = vshrl.u32 %v403, 7
    %v405 = vsub.s32 %v402, %v404
    %v406 = vrot.slane %v390, %v405
    %v408 = vunpack.c.l.s4 1966171168
    %v409 = vunpack.c.0.s8 %v408
    %v410 = vlaneseq
    %v411 = vshrl.u32 %v410, 7
    %v412 = vsub.s32 %v409, %v411
    %v413 = vrot.slane %v397, %v412
    %v415 = vunpack.c.l.s4 1966171168
    %v416 = vunpack.c.0.s8 %v415
    %v417 = vlaneseq
    %v418 = vshrl.u32 %v417, 7
    %v419 = vsub.s32 %v416, %v418
    %v420 = vrot.slane %v398, %v419
    %v422 = vunpack.c.l.s4 1966171168
    %v423 = vunpack.c.0.s8 %v422
    %v424 = vlaneseq
    %v425 = vshrl.u32 %v424, 7
    %v426 = vsub.s32 %v423, %v425
    %v427 = vrot.slane %v399, %v426
    %v428 = vcombine.high %v406, %v406
    %v429 = vcombine.high %v413, %v413
    %v430 = vcombine.high %v420, %v420
    %v431 = vcombine.high %v427, %v427
    %v432 = vlaneseq
    %v433 = vshrl.u32 %v432, 7
    %v434 = vsub.s32 0, %v433
    %v435 = vrot.slane %v357, %v434
    %v436 = vlaneseq
    %v437 = vshrl.u32 %v436, 7
    %v438 = vsub.s32 0, %v437
    %v439 = vrot.slane %v371, %v438
    %v440 = vlaneseq
    %v441 = vshrl.u32 %v440, 7
    %v442 = vsub.s32 0, %v441
    %v443 = vrot.slane %v379, %v442
    %v444 = vlaneseq
    %v445 = vshrl.u32 %v444, 7
    %v446 = vsub.s32 0, %v445
    %v447 = vrot.slane %v381, %v446
    %v448 = vlaneseq
    %v449 = vshrl.u32 %v448, 7
    %v450 = vsub.s32 0, %v449
    %v451 = vrot.slane %v364, %v450
    %v452 = vlaneseq
    %v453 = vshrl.u32 %v452, 7
    %v454 = vsub.s32 0, %v453
    %v455 = vrot.slane %v378, %v454
    %v456 = vlaneseq
    %v457 = vshrl.u32 %v456, 7
    %v458 = vsub.s32 0, %v457
    %v459 = vrot.slane %v380, %v458
    %v460 = vlaneseq
    %v461 = vshrl.u32 %v460, 7
    %v462 = vsub.s32 0, %v461
    %v463 = vrot.slane %v382, %v462
    %v464 = vlaneseq
    %v465 = vshrl.u32 %v464, 7
    %v466 = vsub.s32 0, %v465
    %v467 = vrot.slane %v406, %v466
    %v468 = vlaneseq
    %v469 = vshrl.u32 %v468, 7
    %v470 = vsub.s32 0, %v469
    %v471 = vrot.slane %v420, %v470
    %v472 = vlaneseq
    %v473 = vshrl.u32 %v472, 7
    %v474 = vsub.s32 0, %v473
    %v475 = vrot.slane %v428, %v474
    %v476 = vlaneseq
    %v477 = vshrl.u32 %v476, 7
    %v478 = vsub.s32 0, %v477
    %v479 = vrot.slane %v430, %v478
    %v480 = vlaneseq
    %v481 = vshrl.u32 %v480, 7
    %v482 = vsub.s32 0, %v481
    %v483 = vrot.slane %v413, %v482
    %v484 = vlaneseq
    %v485 = vshrl.u32 %v484, 7
    %v486 = vsub.s32 0, %v485
    %v487 = vrot.slane %v427, %v486
    %v488 = vlaneseq
    %v489 = vshrl.u32 %v488, 7
    %v490 = vsub.s32 0, %v489
    %v491 = vrot.slane %v429, %v490
    %v492 = vlaneseq
    %v493 = vshrl.u32 %v492, 7
    %v494 = vsub.s32 0, %v493
    %v495 = vrot.slane %v431, %v494
    %v512 = vmul.f32 %v435, %v180
    %v513 = vmul.f32 %v439, %v184
    %v514 = vmul.f32 %v443, %v190
    %v515 = vmul.f32 %v447, %v194
    %v516 = vmul.f32 %v451, %v200
    %v517 = vmul.f32 %v455, %v204
    %v518 = vmul.f32 %v459, %v210
    %v519 = vmul.f32 %v463, %v214
    %v520 = vmul.f32 %v467, %v220
    %v521 = vmul.f32 %v471, %v224
    %v522 = vmul.f32 %v475, %v230
    %v523 = vmul.f32 %v479, %v234
    %v524 = vmul.f32 %v483, %v240
    %v525 = vmul.f32 %v487, %v244
    %v526 = vmul.f32 %v491, %v250
    %v527 = vmul.f32 %v495, %v254
    %528 = vadd.xlane.f32.xlu0 %v512
    %v529 = vpop.xlane.xlu0 %528
    %530 = vadd.xlane.f32.xlu0 %v513
    %v531 = vpop.xlane.xlu0 %530
    %532 = vadd.xlane.f32.xlu0 %v514
    %v533 = vpop.xlane.xlu0 %532
    %534 = vadd.xlane.f32.xlu0 %v515
    %v535 = vpop.xlane.xlu0 %534
    %536 = vadd.xlane.f32.xlu0 %v516
    %v537 = vpop.xlane.xlu0 %536
    %538 = vadd.xlane.f32.xlu0 %v517
    %v539 = vpop.xlane.xlu0 %538
    %540 = vadd.xlane.f32.xlu0 %v518
    %v541 = vpop.xlane.xlu0 %540
    %542 = vadd.xlane.f32.xlu0 %v519
    %v543 = vpop.xlane.xlu0 %542
    %544 = vadd.xlane.f32.xlu0 %v520
    %v545 = vpop.xlane.xlu0 %544
    %546 = vadd.xlane.f32.xlu0 %v521
    %v547 = vpop.xlane.xlu0 %546
    %548 = vadd.xlane.f32.xlu0 %v522
    %v549 = vpop.xlane.xlu0 %548
    %550 = vadd.xlane.f32.xlu0 %v523
    %v551 = vpop.xlane.xlu0 %550
    %552 = vadd.xlane.f32.xlu0 %v524
    %v553 = vpop.xlane.xlu0 %552
    %554 = vadd.xlane.f32.xlu0 %v525
    %v555 = vpop.xlane.xlu0 %554
    %556 = vadd.xlane.f32.xlu0 %v526
    %v557 = vpop.xlane.xlu0 %556
    %558 = vadd.xlane.f32.xlu0 %v527
    %v559 = vpop.xlane.xlu0 %558
    %v560 = vld [vmem:[%s0] sm:$0xff]
    %v561 = vld [vmem:[%s0 + $0x8] sm:$0xff]
    %v562 = vlaneseq
    %v563 = vand.u32 %v562, 127
    %v564 = vsub.s32 %v560, 1
    %v565 = vsub.s32 %v561, 1
    %566 = vset.pattern.permute.xlu0 0
    %567 = vperm.xlu0 %566, %v564
    %v568 = vpop.permute.xlu0 %567
    %569 = vset.pattern.permute.xlu0 0
    %570 = vperm.xlu0 %569, %v565
    %v571 = vpop.permute.xlu0 %570
    %vm572 = vcmp.lt.s32.totalorder %v563, %v568
    %vm573 = vcmp.lt.s32.totalorder %v563, %v571
    %v590 = vlaneseq
    %v591 = vshrl.u32 %v590, 7
    %v592 = vsub.s32 %v563, %v591
    %v593 = vrot.slane %v529, %v592
    %v594 = vlaneseq
    %v595 = vshrl.u32 %v594, 7
    %v596 = vsub.s32 %v563, %v595
    %v597 = vrot.slane %v531, %v596
    %v598 = vlaneseq
    %v599 = vshrl.u32 %v598, 7
    %v600 = vsub.s32 %v563, %v599
    %v601 = vrot.slane %v533, %v600
    %v602 = vlaneseq
    %v603 = vshrl.u32 %v602, 7
    %v604 = vsub.s32 %v563, %v603
    %v605 = vrot.slane %v535, %v604
    %v606 = vlaneseq
    %v607 = vshrl.u32 %v606, 7
    %v608 = vsub.s32 %v563, %v607
    %v609 = vrot.slane %v537, %v608
    %v610 = vlaneseq
    %v611 = vshrl.u32 %v610, 7
    %v612 = vsub.s32 %v563, %v611
    %v613 = vrot.slane %v539, %v612
    %v614 = vlaneseq
    %v615 = vshrl.u32 %v614, 7
    %v616 = vsub.s32 %v563, %v615
    %v617 = vrot.slane %v541, %v616
    %v618 = vlaneseq
    %v619 = vshrl.u32 %v618, 7
    %v620 = vsub.s32 %v563, %v619
    %v621 = vrot.slane %v543, %v620
    %v622 = vlaneseq
    %v623 = vshrl.u32 %v622, 7
    %v624 = vsub.s32 %v563, %v623
    %v625 = vrot.slane %v545, %v624
    %v626 = vlaneseq
    %v627 = vshrl.u32 %v626, 7
    %v628 = vsub.s32 %v563, %v627
    %v629 = vrot.slane %v547, %v628
    %v630 = vlaneseq
    %v631 = vshrl.u32 %v630, 7
    %v632 = vsub.s32 %v563, %v631
    %v633 = vrot.slane %v549, %v632
    %v634 = vlaneseq
    %v635 = vshrl.u32 %v634, 7
    %v636 = vsub.s32 %v563, %v635
    %v637 = vrot.slane %v551, %v636
    %v638 = vlaneseq
    %v639 = vshrl.u32 %v638, 7
    %v640 = vsub.s32 %v563, %v639
    %v641 = vrot.slane %v553, %v640
    %v642 = vlaneseq
    %v643 = vshrl.u32 %v642, 7
    %v644 = vsub.s32 %v563, %v643
    %v645 = vrot.slane %v555, %v644
    %v646 = vlaneseq
    %v647 = vshrl.u32 %v646, 7
    %v648 = vsub.s32 %v563, %v647
    %v649 = vrot.slane %v557, %v648
    %v650 = vlaneseq
    %v651 = vshrl.u32 %v650, 7
    %v652 = vsub.s32 %v563, %v651
    %v653 = vrot.slane %v559, %v652
    %vm654 = vcmask 1041409
    %v655 = vsel %vm654, %v597, %v593
    %vm656 = vcmask 1042434
    %v657 = vsel %vm656, %v601, %v655
    %vm658 = vcmask 1043459
    %v659 = vsel %vm658, %v605, %v657
    %vm660 = vcmask 1044484
    %v661 = vsel %vm660, %v609, %v659
    %vm662 = vcmask 1045509
    %v663 = vsel %vm662, %v613, %v661
    %vm664 = vcmask 1046534
    %v665 = vsel %vm664, %v617, %v663
    %vm666 = vcmask 1047559
    %v667 = vsel %vm666, %v621, %v665
    %v668 = vsel %vm654, %v629, %v625
    %v669 = vsel %vm656, %v633, %v668
    %v670 = vsel %vm658, %v637, %v669
    %v671 = vsel %vm660, %v641, %v670
    %v672 = vsel %vm662, %v645, %v671
    %v673 = vsel %vm664, %v649, %v672
    %v674 = vsel %vm666, %v653, %v673
    %v677 = vsel %vm572, %v667, -3.4028235e+38
    %v678 = vsel %vm573, %v674, -3.4028235e+38
    %vm679 = vcmask 64512
    %v680 = vsel %vm679, %v677, -inf
    %681 = vmax.xlane.f32.xlu0 %v680
    %v682 = vpop.xlane.xlu0 %681
    %v683 = vsel %vm679, %v678, -inf
    %684 = vmax.xlane.f32.xlu0 %v683
    %v685 = vpop.xlane.xlu0 %684
    %v686 = vsub.f32 %v677, %v682
    %v687 = vsub.f32 %v678, %v685
    %v688 = vmul.f32 %v686, 1.442695
    %v689 = vpow.pop %v688
    %v690 = vmul.f32 %v687, 1.442695
    %v691 = vpow.pop %v690
    %v692 = vsel %vm572, %v689, 0.0
    %v693 = vsel %vm573, %v691, 0.0
    %v694 = vsel %vm679, %v692, 0.0
    %695 = vadd.xlane.f32.xlu0 %v694
    %v696 = vpop.xlane.xlu0 %695
    %v697 = vsel %vm679, %v693, 0.0
    %698 = vadd.xlane.f32.xlu0 %v697
    %v699 = vpop.xlane.xlu0 %698
    %vm700 = vcmp.gt.f32.partialorder %v696, 0.0
    %vm701 = vcmp.gt.f32.partialorder %v699, 0.0
    %v702 = vsel %vm700, %v696, 1.0
    %v703 = vsel %vm701, %v699, 1.0
    %v704 = vrcp.pop %v702
    %v705 = vrcp.pop %v703
    %v706 = vmul.f32 %v692, %v704
    %v707 = vmul.f32 %v693, %v705
    %v708 = vlaneseq
    %v709 = vshrl.u32 %v708, 7
    %v710 = vsub.s32 0, %v709
    %v711 = vrot.slane %v706, %v710
    %713 = vbcast.lane.b32.xlu0 %v711, 256
    %v714 = vpop.permute.xlu0 %713
    %v715 = vlaneseq
    %v716 = vshrl.u32 %v715, 7
    %v717 = vsub.s32 1, %v716
    %v718 = vrot.slane %v706, %v717
    %720 = vbcast.lane.b32.xlu0 %v718, 256
    %v721 = vpop.permute.xlu0 %720
    %v722 = vlaneseq
    %v723 = vshrl.u32 %v722, 7
    %v724 = vsub.s32 2, %v723
    %v725 = vrot.slane %v706, %v724
    %727 = vbcast.lane.b32.xlu0 %v725, 256
    %v728 = vpop.permute.xlu0 %727
    %v729 = vlaneseq
    %v730 = vshrl.u32 %v729, 7
    %v731 = vsub.s32 3, %v730
    %v732 = vrot.slane %v706, %v731
    %734 = vbcast.lane.b32.xlu0 %v732, 256
    %v735 = vpop.permute.xlu0 %734
    %v736 = vlaneseq
    %v737 = vshrl.u32 %v736, 7
    %v738 = vsub.s32 4, %v737
    %v739 = vrot.slane %v706, %v738
    %741 = vbcast.lane.b32.xlu0 %v739, 256
    %v742 = vpop.permute.xlu0 %741
    %v743 = vlaneseq
    %v744 = vshrl.u32 %v743, 7
    %v745 = vsub.s32 5, %v744
    %v746 = vrot.slane %v706, %v745
    %748 = vbcast.lane.b32.xlu0 %v746, 256
    %v749 = vpop.permute.xlu0 %748
    %v750 = vlaneseq
    %v751 = vshrl.u32 %v750, 7
    %v752 = vsub.s32 6, %v751
    %v753 = vrot.slane %v706, %v752
    %755 = vbcast.lane.b32.xlu0 %v753, 256
    %v756 = vpop.permute.xlu0 %755
    %v757 = vlaneseq
    %v758 = vshrl.u32 %v757, 7
    %v759 = vsub.s32 7, %v758
    %v760 = vrot.slane %v706, %v759
    %762 = vbcast.lane.b32.xlu0 %v760, 256
    %v763 = vpop.permute.xlu0 %762
    %v764 = vlaneseq
    %v765 = vshrl.u32 %v764, 7
    %v766 = vsub.s32 0, %v765
    %v767 = vrot.slane %v707, %v766
    %769 = vbcast.lane.b32.xlu0 %v767, 256
    %v770 = vpop.permute.xlu0 %769
    %v771 = vlaneseq
    %v772 = vshrl.u32 %v771, 7
    %v773 = vsub.s32 1, %v772
    %v774 = vrot.slane %v707, %v773
    %776 = vbcast.lane.b32.xlu0 %v774, 256
    %v777 = vpop.permute.xlu0 %776
    %v778 = vlaneseq
    %v779 = vshrl.u32 %v778, 7
    %v780 = vsub.s32 2, %v779
    %v781 = vrot.slane %v707, %v780
    %783 = vbcast.lane.b32.xlu0 %v781, 256
    %v784 = vpop.permute.xlu0 %783
    %v785 = vlaneseq
    %v786 = vshrl.u32 %v785, 7
    %v787 = vsub.s32 3, %v786
    %v788 = vrot.slane %v707, %v787
    %790 = vbcast.lane.b32.xlu0 %v788, 256
    %v791 = vpop.permute.xlu0 %790
    %v792 = vlaneseq
    %v793 = vshrl.u32 %v792, 7
    %v794 = vsub.s32 4, %v793
    %v795 = vrot.slane %v707, %v794
    %797 = vbcast.lane.b32.xlu0 %v795, 256
    %v798 = vpop.permute.xlu0 %797
    %v799 = vlaneseq
    %v800 = vshrl.u32 %v799, 7
    %v801 = vsub.s32 5, %v800
    %v802 = vrot.slane %v707, %v801
    %804 = vbcast.lane.b32.xlu0 %v802, 256
    %v805 = vpop.permute.xlu0 %804
    %v806 = vlaneseq
    %v807 = vshrl.u32 %v806, 7
    %v808 = vsub.s32 6, %v807
    %v809 = vrot.slane %v707, %v808
    %811 = vbcast.lane.b32.xlu0 %v809, 256
    %v812 = vpop.permute.xlu0 %811
    %v813 = vlaneseq
    %v814 = vshrl.u32 %v813, 7
    %v815 = vsub.s32 7, %v814
    %v816 = vrot.slane %v707, %v815
    %818 = vbcast.lane.b32.xlu0 %v816, 256
    %v819 = vpop.permute.xlu0 %818
    %v820 = vmul.f32 %v714, %v182
    %v821 = vmul.f32 %v721, %v186
    %v822 = vmul.f32 %v728, %v192
    %v823 = vmul.f32 %v735, %v196
    %v824 = vmul.f32 %v742, %v202
    %v825 = vmul.f32 %v749, %v206
    %v826 = vmul.f32 %v756, %v212
    %v827 = vmul.f32 %v763, %v216
    %v828 = vmul.f32 %v770, %v222
    %v829 = vmul.f32 %v777, %v226
    %v830 = vmul.f32 %v784, %v232
    %v831 = vmul.f32 %v791, %v236
    %v832 = vmul.f32 %v798, %v242
    %v833 = vmul.f32 %v805, %v246
    %v834 = vmul.f32 %v812, %v252
    %v835 = vmul.f32 %v819, %v256
    %v836 = vrot.slane %v820, 4
    %v837 = vadd.f32 %v820, %v836
    %v838 = vrot.slane %v837, 2
    %v839 = vadd.f32 %v837, %v838
    %v840 = vrot.slane %v839, 1
    %v841 = vadd.f32 %v839, %v840
    %v842 = vrot.slane %v821, 4
    %v843 = vadd.f32 %v821, %v842
    %v844 = vrot.slane %v843, 2
    %v845 = vadd.f32 %v843, %v844
    %v846 = vrot.slane %v845, 1
    %v847 = vadd.f32 %v845, %v846
    %v848 = vrot.slane %v822, 4
    %v849 = vadd.f32 %v822, %v848
    %v850 = vrot.slane %v849, 2
    %v851 = vadd.f32 %v849, %v850
    %v852 = vrot.slane %v851, 1
    %v853 = vadd.f32 %v851, %v852
    %v854 = vrot.slane %v823, 4
    %v855 = vadd.f32 %v823, %v854
    %v856 = vrot.slane %v855, 2
    %v857 = vadd.f32 %v855, %v856
    %v858 = vrot.slane %v857, 1
    %v859 = vadd.f32 %v857, %v858
    %v860 = vrot.slane %v824, 4
    %v861 = vadd.f32 %v824, %v860
    %v862 = vrot.slane %v861, 2
    %v863 = vadd.f32 %v861, %v862
    %v864 = vrot.slane %v863, 1
    %v865 = vadd.f32 %v863, %v864
    %v866 = vrot.slane %v825, 4
    %v867 = vadd.f32 %v825, %v866
    %v868 = vrot.slane %v867, 2
    %v869 = vadd.f32 %v867, %v868
    %v870 = vrot.slane %v869, 1
    %v871 = vadd.f32 %v869, %v870
    %v872 = vrot.slane %v826, 4
    %v873 = vadd.f32 %v826, %v872
    %v874 = vrot.slane %v873, 2
    %v875 = vadd.f32 %v873, %v874
    %v876 = vrot.slane %v875, 1
    %v877 = vadd.f32 %v875, %v876
    %v878 = vrot.slane %v827, 4
    %v879 = vadd.f32 %v827, %v878
    %v880 = vrot.slane %v879, 2
    %v881 = vadd.f32 %v879, %v880
    %v882 = vrot.slane %v881, 1
    %v883 = vadd.f32 %v881, %v882
    %v884 = vrot.slane %v828, 4
    %v885 = vadd.f32 %v828, %v884
    %v886 = vrot.slane %v885, 2
    %v887 = vadd.f32 %v885, %v886
    %v888 = vrot.slane %v887, 1
    %v889 = vadd.f32 %v887, %v888
    %v890 = vrot.slane %v829, 4
    %v891 = vadd.f32 %v829, %v890
    %v892 = vrot.slane %v891, 2
    %v893 = vadd.f32 %v891, %v892
    %v894 = vrot.slane %v893, 1
    %v895 = vadd.f32 %v893, %v894
    %v896 = vrot.slane %v830, 4
    %v897 = vadd.f32 %v830, %v896
    %v898 = vrot.slane %v897, 2
    %v899 = vadd.f32 %v897, %v898
    %v900 = vrot.slane %v899, 1
    %v901 = vadd.f32 %v899, %v900
    %v902 = vrot.slane %v831, 4
    %v903 = vadd.f32 %v831, %v902
    %v904 = vrot.slane %v903, 2
    %v905 = vadd.f32 %v903, %v904
    %v906 = vrot.slane %v905, 1
    %v907 = vadd.f32 %v905, %v906
    %v908 = vrot.slane %v832, 4
    %v909 = vadd.f32 %v832, %v908
    %v910 = vrot.slane %v909, 2
    %v911 = vadd.f32 %v909, %v910
    %v912 = vrot.slane %v911, 1
    %v913 = vadd.f32 %v911, %v912
    %v914 = vrot.slane %v833, 4
    %v915 = vadd.f32 %v833, %v914
    %v916 = vrot.slane %v915, 2
    %v917 = vadd.f32 %v915, %v916
    %v918 = vrot.slane %v917, 1
    %v919 = vadd.f32 %v917, %v918
    %v920 = vrot.slane %v834, 4
    %v921 = vadd.f32 %v834, %v920
    %v922 = vrot.slane %v921, 2
    %v923 = vadd.f32 %v921, %v922
    %v924 = vrot.slane %v923, 1
    %v925 = vadd.f32 %v923, %v924
    %v926 = vrot.slane %v835, 4
    %v927 = vadd.f32 %v835, %v926
    %v928 = vrot.slane %v927, 2
    %v929 = vadd.f32 %v927, %v928
    %v930 = vrot.slane %v929, 1
    %v931 = vadd.f32 %v929, %v930
    %v932 = vtanh.pop %v841
    %v933 = vtanh.pop %v847
    %v934 = vtanh.pop %v853
    %v935 = vtanh.pop %v859
    %v936 = vtanh.pop %v865
    %v937 = vtanh.pop %v871
    %v938 = vtanh.pop %v877
    %v939 = vtanh.pop %v883
    %v940 = vtanh.pop %v889
    %v941 = vtanh.pop %v895
    %v942 = vtanh.pop %v901
    %v943 = vtanh.pop %v907
    %v944 = vtanh.pop %v913
    %v945 = vtanh.pop %v919
    %v946 = vtanh.pop %v925
    %v947 = vtanh.pop %v931
    %v964 = vsel %vm654, %v933, %v932
    %v965 = vsel %vm656, %v934, %v964
    %v966 = vsel %vm658, %v935, %v965
    %v967 = vsel %vm660, %v936, %v966
    %v968 = vsel %vm662, %v937, %v967
    %v969 = vsel %vm664, %v938, %v968
    %v970 = vsel %vm666, %v939, %v969
    %v971 = vsel %vm654, %v941, %v940
    %v972 = vsel %vm656, %v942, %v971
    %v973 = vsel %vm658, %v943, %v972
    %v974 = vsel %vm660, %v944, %v973
    %v975 = vsel %vm662, %v945, %v974
    %v976 = vsel %vm664, %v946, %v975
    %v977 = vsel %vm666, %v947, %v976
    %980 = vst [vmem:[#allocation2] sm:$0xff] %v970
    %981 = vst [vmem:[#allocation2 + $0x8] sm:$0xff] %v977
    // Predicated region
    $region30: #{tpu_custom_call.1} parent=1 // pred_check
      _
    $region31: #{tpu_custom_call.1} parent=1 // pred_check_branch
      %983 = sbr.rel (0) target = $region33
    $region32: #{tpu_custom_call.1} parent=1 // pred_region
      %s985 = ssub.s32 256, 256
      %986 = vsyncadd [#allocation3], %s985
      %s987 = sshll.u32 [#allocation2], 4
      %s988 = int_to_ptr.vmem [resolvable:$true] %s987
      %993 = dma.vmem_to_hbm [thread:$0]  %s988, 256, %s7, [#allocation3], 128, 128, 8
    $region33: #{tpu_custom_call.1} parent=1 // pred_fallthru
      _
    // Predicated region
    $region34: #{tpu_custom_call.1} parent=1 // pred_check
      _
    $region35: #{tpu_custom_call.1} parent=1 // pred_check_branch
      %995 = sbr.rel (0) target = $region37
    $region36: #{tpu_custom_call.1} parent=1 // pred_region
      %996 = dma.done [#allocation3], 256
    $region37: #{tpu_custom_call.1} parent=1 // pred_fallthru
      _
    %997 = vsyncpa [#allocation3], 1

</llo_original>
